<compile_context>
chip_gen: v5e
topology: v5e:2x2
jax: 0.10.0
libtpu: 0.0.40
codegen_flags: <defaults>
</compile_context>

<pallas_src>
import jax
import jax.numpy as jnp
from jax.experimental import pallas as pl
from jax.experimental.pallas import tpu as pltpu

N_HISTORY = 5
N_HORIZON = 5
WIDTH = 200
IN_DIM = N_HISTORY * 3          # 15
OUT_DIM = N_HORIZON * 2         # 10
OUT_PAD = 128                   # lane-dense padded output width


def _round_up(n, m):
    return ((n + m - 1) // m) * m


def _mlp_kernel(x_ref, w1_ref, b1_ref, w2_ref, b2_ref, w3_ref, b3_ref, o_ref):
    # fc1 + ReLU  (bf16 MXU operands, f32 accumulation, f32 bias/ReLU)
    x = x_ref[...].astype(jnp.bfloat16)
    h1 = jnp.dot(x, w1_ref[...], preferred_element_type=jnp.float32)
    h1 = jnp.maximum(h1 + b1_ref[...], 0.0)
    # fc2 + ReLU
    h2 = jnp.dot(h1.astype(jnp.bfloat16), w2_ref[...],
                 preferred_element_type=jnp.float32)
    h2 = jnp.maximum(h2 + b2_ref[...], 0.0)
    # out (no activation) — output lanes padded to 128 for unmasked stores
    y = jnp.dot(h2.astype(jnp.bfloat16), w3_ref[...],
                preferred_element_type=jnp.float32)
    o_ref[...] = (y + b3_ref[...]).astype(o_ref.dtype)


def predictor_forward(x, w1, b1, w2, b2, w3, b3, *, block_batch=512):
    """x: [B, 15] float32 -> [B, 10] float32."""
    batch = x.shape[0]

    # Pad the narrow output dim to a full 128-lane slab (sliced off below).
    w3p = jnp.pad(w3, ((0, 0), (0, OUT_PAD - OUT_DIM)))
    b3p = jnp.pad(b3, ((0, 0), (0, OUT_PAD - OUT_DIM)))

    # bf16 weights: halves resident VMEM + weight DMA, full-rate MXU on v6e/v7x.
    w1b = w1.astype(jnp.bfloat16)
    w2b = w2.astype(jnp.bfloat16)
    w3b = w3p.astype(jnp.bfloat16)

    # Batch tile: multiple of 8 (sublane), capped at block_batch.
    tb = min(block_batch, _round_up(batch, 8))
    padded_batch = _round_up(batch, tb)
    xp = x if padded_batch == batch else jnp.pad(
        x, ((0, padded_batch - batch), (0, 0)))

    grid = (padded_batch // tb,)

    resident = lambda shape: pl.BlockSpec(shape, lambda i: (0, 0))

    out = pl.pallas_call(
        _mlp_kernel,
        out_shape=jax.ShapeDtypeStruct((padded_batch, OUT_PAD), jnp.float32),
        grid=grid,
        in_specs=[
            pl.BlockSpec((tb, IN_DIM), lambda i: (i, 0)),   # x: tiled over batch
            resident(w1b.shape), resident(b1.shape),         # weights/biases stay
            resident(w2b.shape), resident(b2.shape),         # resident in VMEM
            resident(w3b.shape), resident(b3p.shape),
        ],
        out_specs=pl.BlockSpec((tb, OUT_PAD), lambda i: (i, 0)),
        compiler_params=pltpu.CompilerParams(
            dimension_semantics=("parallel",),   # shard batch across TCs (v7x)
            vmem_limit_bytes=16 * 1024 * 1024,
        ),
    )(xp, w1b, b1, w2b, b2, w3b, b3p)

    return out[:batch, :OUT_DIM]


def _init_params(key):
    """Deterministic parameter init (Kaiming-uniform-like, matching the shapes
    of the PyTorch module). Weights stored as [in, out]."""
    ks = jax.random.split(key, 6)

    def linear(kw, kb, fan_in, fan_out):
        bound = 1.0 / jnp.sqrt(jnp.float32(fan_in))
        w = jax.random.uniform(kw, (fan_in, fan_out), jnp.float32, -bound, bound)
        b = jax.random.uniform(kb, (1, fan_out), jnp.float32, -bound, bound)
        return w, b

    w1, b1 = linear(ks[0], ks[1], IN_DIM, WIDTH)
    w2, b2 = linear(ks[2], ks[3], WIDTH, WIDTH)
    w3, b3 = linear(ks[4], ks[5], WIDTH, OUT_DIM)
    return w1, b1, w2, b2, w3, b3


def _reference_forward(x, w1, b1, w2, b2, w3, b3):
    """Reference mimicking the kernel's bf16-operand / f32-accumulate math."""
    bf = jnp.bfloat16
    h1 = jnp.dot(x.astype(bf), w1.astype(bf), preferred_element_type=jnp.float32)
    h1 = jnp.maximum(h1 + b1, 0.0)
    h2 = jnp.dot(h1.astype(bf), w2.astype(bf), preferred_element_type=jnp.float32)
    h2 = jnp.maximum(h2 + b2, 0.0)
    y = jnp.dot(h2.astype(bf), w3.astype(bf), preferred_element_type=jnp.float32)
    return y + b3


if __name__ == "__main__":
    key = jax.random.PRNGKey(0)
    k_params, k_x = jax.random.split(key)

    params = _init_params(k_params)
    batch = 8
    x = jax.random.normal(k_x, (batch, IN_DIM), jnp.float32)

    out = predictor_forward(x, *params)
    out = jax.block_until_ready(out)

    ref = _reference_forward(x, *params)
    assert out.shape == (batch, OUT_DIM)
    assert jnp.allclose(out, ref, atol=1e-2, rtol=1e-2), (
        float(jnp.max(jnp.abs(out - ref))))

    print("KERNEL_OK")
</pallas_src>

<mosaic_0001>
module attributes {stable_mosaic.version = 11 : i64} {
  func.func @_mlp_kernel(%arg0: i32, %arg1: memref<8x15xf32, #tpu.memory_space<vmem>>, %arg2: memref<15x200xbf16, #tpu.memory_space<vmem>>, %arg3: memref<1x200xf32, #tpu.memory_space<vmem>>, %arg4: memref<200x200xbf16, #tpu.memory_space<vmem>>, %arg5: memref<1x200xf32, #tpu.memory_space<vmem>>, %arg6: memref<200x128xbf16, #tpu.memory_space<vmem>>, %arg7: memref<1x128xf32, #tpu.memory_space<vmem>>, %arg8: memref<8x128xf32, #tpu.memory_space<vmem>>) attributes {dimension_semantics = [#tpu.dimension_semantics<parallel>], iteration_bounds = array<i64: 1>, scalar_prefetch = 0 : i64, scratch_operands = 0 : i64, tpu.core_type = #tpu.core_type<tc>, window_params = [{transform_indices = @transform_0, window_bounds = array<i64: 8, 15>}, {pipeline_mode = #tpu.pipeline_mode<synchronous>, transform_indices = @transform_1, window_bounds = array<i64: 15, 200>}, {pipeline_mode = #tpu.pipeline_mode<synchronous>, transform_indices = @transform_2, window_bounds = array<i64: 1, 200>}, {pipeline_mode = #tpu.pipeline_mode<synchronous>, transform_indices = @transform_3, window_bounds = array<i64: 200, 200>}, {pipeline_mode = #tpu.pipeline_mode<synchronous>, transform_indices = @transform_4, window_bounds = array<i64: 1, 200>}, {pipeline_mode = #tpu.pipeline_mode<synchronous>, transform_indices = @transform_5, window_bounds = array<i64: 200, 128>}, {pipeline_mode = #tpu.pipeline_mode<synchronous>, transform_indices = @transform_6, window_bounds = array<i64: 1, 128>}, {transform_indices = @transform_7, window_bounds = array<i64: 8, 128>}]} {
    %c0 = arith.constant 0 : index
    %c0_0 = arith.constant 0 : index
    %0 = vector.load %arg1[%c0, %c0_0] : memref<8x15xf32, #tpu.memory_space<vmem>>, vector<8x15xf32>
    %1 = arith.truncf %0 : vector<8x15xf32> to vector<8x15xbf16>
    %c0_1 = arith.constant 0 : index
    %c0_2 = arith.constant 0 : index
    %2 = vector.load %arg2[%c0_1, %c0_2] : memref<15x200xbf16, #tpu.memory_space<vmem>>, vector<15x200xbf16>
    %cst = arith.constant dense<0.000000e+00> : vector<8x200xf32>
    %3 = tpu.matmul %1, %2, %cst {dimension_numbers = #tpu.dot_dimension_numbers<[1], [0], [0], [1], [0, 0, 1, 1], [], []>} : vector<8x15xbf16>, vector<15x200xbf16>, vector<8x200xf32> -> vector<8x200xf32>
    %c0_3 = arith.constant 0 : index
    %c0_4 = arith.constant 0 : index
    %4 = vector.load %arg3[%c0_3, %c0_4] : memref<1x200xf32, #tpu.memory_space<vmem>>, vector<1x200xf32>
    %5 = vector.broadcast %4 : vector<1x200xf32> to vector<8x200xf32>
    %6 = arith.addf %3, %5 : vector<8x200xf32>
    %cst_5 = arith.constant 0.000000e+00 : f32
    %7 = vector.broadcast %cst_5 : f32 to vector<8x200xf32>
    %8 = arith.maximumf %6, %7 : vector<8x200xf32>
    %9 = arith.truncf %8 : vector<8x200xf32> to vector<8x200xbf16>
    %c0_6 = arith.constant 0 : index
    %c0_7 = arith.constant 0 : index
    %10 = vector.load %arg4[%c0_6, %c0_7] : memref<200x200xbf16, #tpu.memory_space<vmem>>, vector<200x200xbf16>
    %cst_8 = arith.constant dense<0.000000e+00> : vector<8x200xf32>
    %11 = tpu.matmul %9, %10, %cst_8 {dimension_numbers = #tpu.dot_dimension_numbers<[1], [0], [0], [1], [0, 0, 1, 1], [], []>} : vector<8x200xbf16>, vector<200x200xbf16>, vector<8x200xf32> -> vector<8x200xf32>
    %c0_9 = arith.constant 0 : index
    %c0_10 = arith.constant 0 : index
    %12 = vector.load %arg5[%c0_9, %c0_10] : memref<1x200xf32, #tpu.memory_space<vmem>>, vector<1x200xf32>
    %13 = vector.broadcast %12 : vector<1x200xf32> to vector<8x200xf32>
    %14 = arith.addf %11, %13 : vector<8x200xf32>
    %cst_11 = arith.constant 0.000000e+00 : f32
    %15 = vector.broadcast %cst_11 : f32 to vector<8x200xf32>
    %16 = arith.maximumf %14, %15 : vector<8x200xf32>
    %17 = arith.truncf %16 : vector<8x200xf32> to vector<8x200xbf16>
    %c0_12 = arith.constant 0 : index
    %c0_13 = arith.constant 0 : index
    %18 = vector.load %arg6[%c0_12, %c0_13] : memref<200x128xbf16, #tpu.memory_space<vmem>>, vector<200x128xbf16>
    %cst_14 = arith.constant dense<0.000000e+00> : vector<8x128xf32>
    %19 = tpu.matmul %17, %18, %cst_14 {dimension_numbers = #tpu.dot_dimension_numbers<[1], [0], [0], [1], [0, 0, 1, 1], [], []>} : vector<8x200xbf16>, vector<200x128xbf16>, vector<8x128xf32> -> vector<8x128xf32>
    %c0_15 = arith.constant 0 : index
    %c0_16 = arith.constant 0 : index
    %20 = vector.load %arg7[%c0_15, %c0_16] : memref<1x128xf32, #tpu.memory_space<vmem>>, vector<1x128xf32>
    %21 = vector.broadcast %20 : vector<1x128xf32> to vector<8x128xf32>
    %22 = arith.addf %19, %21 : vector<8x128xf32>
    %c0_17 = arith.constant 0 : index
    %c0_18 = arith.constant 0 : index
    %23 = vector.load %arg8[%c0_17, %c0_18] : memref<8x128xf32, #tpu.memory_space<vmem>>, vector<8x128xf32>
    tpu.vector_store %arg8[%c0_17, %c0_18], %22 {strides = array<i32>} : memref<8x128xf32, #tpu.memory_space<vmem>>, vector<8x128xf32>,
    return
  }
  func.func @transform_0(%arg0: i32) -> (i32, i32) {
    %c0_i32 = arith.constant 0 : i32
    %c0_i32_0 = arith.constant 0 : i32
    return %arg0, %c0_i32 : i32, i32
  }
  func.func @transform_1(%arg0: i32) -> (i32, i32) {
    %c0_i32 = arith.constant 0 : i32
    %c0_i32_0 = arith.constant 0 : i32
    %c0_i32_1 = arith.constant 0 : i32
    return %c0_i32, %c0_i32_0 : i32, i32
  }
  func.func @transform_2(%arg0: i32) -> (i32, i32) {
    %c0_i32 = arith.constant 0 : i32
    %c0_i32_0 = arith.constant 0 : i32
    %c0_i32_1 = arith.constant 0 : i32
    return %c0_i32, %c0_i32_0 : i32, i32
  }
  func.func @transform_3(%arg0: i32) -> (i32, i32) {
    %c0_i32 = arith.constant 0 : i32
    %c0_i32_0 = arith.constant 0 : i32
    %c0_i32_1 = arith.constant 0 : i32
    return %c0_i32, %c0_i32_0 : i32, i32
  }
  func.func @transform_4(%arg0: i32) -> (i32, i32) {
    %c0_i32 = arith.constant 0 : i32
    %c0_i32_0 = arith.constant 0 : i32
    %c0_i32_1 = arith.constant 0 : i32
    return %c0_i32, %c0_i32_0 : i32, i32
  }
  func.func @transform_5(%arg0: i32) -> (i32, i32) {
    %c0_i32 = arith.constant 0 : i32
    %c0_i32_0 = arith.constant 0 : i32
    %c0_i32_1 = arith.constant 0 : i32
    return %c0_i32, %c0_i32_0 : i32, i32
  }
  func.func @transform_6(%arg0: i32) -> (i32, i32) {
    %c0_i32 = arith.constant 0 : i32
    %c0_i32_0 = arith.constant 0 : i32
    %c0_i32_1 = arith.constant 0 : i32
    return %c0_i32, %c0_i32_0 : i32, i32
  }
  func.func @transform_7(%arg0: i32) -> (i32, i32) {
    %c0_i32 = arith.constant 0 : i32
    %c0_i32_0 = arith.constant 0 : i32
    return %arg0, %c0_i32 : i32, i32
  }
}

</mosaic_0001>

<llo_original>
// kernel: tpu_custom_call.1
$region0: #{tpu_custom_call.1}
  #allocation0 [shape = 'u32[]', space=smem, size = 0x4, offset = 0x4, fixed_abs, tag = 'smem constant byte address 0x4 - core index']
  #allocation1 [shape = 'u32[72,128]{1,0:T(1,128)}', space=vmem, size = 0x9000, scoped, tag = 'internal scratch']
  %s0 = inlined_call_operand.hbm [shape: f32[8,15], index: 0, kind: input, shape index: {}]
  %s1 = inlined_call_operand.hbm [shape: bf16[15,200], index: 1, kind: input, shape index: {}]
  %s2 = inlined_call_operand.hbm [shape: f32[1,200], index: 2, kind: input, shape index: {}]
  %s3 = inlined_call_operand.hbm [shape: bf16[200,200], index: 3, kind: input, shape index: {}]
  %s4 = inlined_call_operand.vmem [shape: f32[1,200], index: 4, kind: input, shape index: {}]
  %s5 = inlined_call_operand.hbm [shape: bf16[200,128], index: 5, kind: input, shape index: {}]
  %s6 = inlined_call_operand.vmem [shape: f32[1,128], index: 6, kind: input, shape index: {}]
  %s7 = inlined_call_operand.hbm [shape: f32[8,128], index: 7, kind: output, shape index: {}]
  %s8 = sld [smem:[#allocation0]]
  $region58: #{tpu_custom_call.1} parent=0
    _
  %s10 = ssub.s32 1, %s8
  %s11 = scalar_select 0, %s10, %s8
  $region1: #{tpu_custom_call.1} parent=0
    #allocation2 [shape = 'u8[4096]{0}', space=vmem, size = 0x1000, scoped, tag = 'input window, operand 0, single buffered']
    #allocation3 [shape = 's32[1]{0}', space=sflag, size = 0x4, scoped, tag = 'scoped memory for tpu_custom_call.1']
    #allocation4 [shape = 's32[1]{0}', space=sflag, size = 0x4, scoped, tag = 'scoped memory for tpu_custom_call.1']
    #allocation5 [shape = 'u8[8192]{0}', space=vmem, size = 0x2000, scoped, tag = 'input window, operand 1, single buffered']
    #allocation6 [shape = 's32[1]{0}', space=sflag, size = 0x4, scoped, tag = 'scoped memory for tpu_custom_call.1']
    #allocation7 [shape = 'u8[1024]{0}', space=vmem, size = 0x400, scoped, tag = 'input window, operand 2, single buffered']
    #allocation8 [shape = 'u8[102400]{0}', space=vmem, size = 0x19000, scoped, tag = 'input window, operand 3, single buffered']
    #allocation9 [shape = 's32[1]{0}', space=sflag, size = 0x4, scoped, tag = 'scoped memory for tpu_custom_call.1']
    #allocation10 [shape = 'u8[51200]{0}', space=vmem, size = 0xc800, scoped, tag = 'input window, operand 5, single buffered']
    #allocation11 [shape = 'u8[4096]{0}', space=vmem, size = 0x1000, scoped, tag = 'output window, operand 0, single buffered']
    %12 = vsyncpa [#allocation3], 0
    %13 = vsyncpa [#allocation6], 0
    %14 = vsyncpa [#allocation9], 0
    %15 = vsyncpa [#allocation4], 0
    // Predicated region
    $region2: #{tpu_custom_call.1} parent=1 // pred_check
      _
    $region3: #{tpu_custom_call.1} parent=1 // pred_check_branch
      %17 = sbr.rel (0) target = $region5
    $region4: #{tpu_custom_call.1} parent=1 // pred_region
      %19 = vsyncadd [#allocation3], 0
      %s21 = sshll.u32 %s0, 4
      %s22 = int_to_ptr.hbm [resolvable:$true] %s21
      %s23 = sshll.u32 [#allocation2], 4
      %s24 = int_to_ptr.vmem [resolvable:$true] %s23
      %26 = dma.hbm_to_vmem [thread:$0]  %s22, 128, %s24, [#allocation3]
    $region5: #{tpu_custom_call.1} parent=1 // pred_fallthru
      _
    // Predicated region
    $region6: #{tpu_custom_call.1} parent=1 // pred_check
      _
    $region7: #{tpu_custom_call.1} parent=1 // pred_check_branch
      %28 = sbr.rel (0) target = $region9
    $region8: #{tpu_custom_call.1} parent=1 // pred_region
      %30 = vsyncadd [#allocation6], 0
      %s31 = sshll.u32 %s1, 4
      %s32 = int_to_ptr.hbm [resolvable:$true] %s31
      %s33 = sshll.u32 [#allocation5], 4
      %s34 = int_to_ptr.vmem [resolvable:$true] %s33
      %39 = dma.hbm_to_vmem [thread:$0]  %s32, 256, %s34, [#allocation6], 128, 128, 8
    $region9: #{tpu_custom_call.1} parent=1 // pred_fallthru
      _
    // Predicated region
    $region10: #{tpu_custom_call.1} parent=1 // pred_check
      _
    $region11: #{tpu_custom_call.1} parent=1 // pred_check_branch
      %41 = sbr.rel (0) target = $region13
    $region12: #{tpu_custom_call.1} parent=1 // pred_region
      %43 = vsyncadd [#allocation6], 0
      %s45 = sshll.u32 %s2, 4
      %s46 = int_to_ptr.hbm [resolvable:$true] %s45
      %s47 = sshll.u32 [#allocation7], 4
      %s48 = int_to_ptr.vmem [resolvable:$true] %s47
      %50 = dma.hbm_to_vmem [thread:$0]  %s46, 32, %s48, [#allocation6]
    $region13: #{tpu_custom_call.1} parent=1 // pred_fallthru
      _
    // Predicated region
    $region14: #{tpu_custom_call.1} parent=1 // pred_check
      _
    $region15: #{tpu_custom_call.1} parent=1 // pred_check_branch
      %52 = sbr.rel (0) target = $region17
    $region16: #{tpu_custom_call.1} parent=1 // pred_region
      %54 = vsyncadd [#allocation9], 0
      %s55 = sshll.u32 %s3, 4
      %s56 = int_to_ptr.hbm [resolvable:$true] %s55
      %s57 = sshll.u32 [#allocation8], 4
      %s58 = int_to_ptr.vmem [resolvable:$true] %s57
      %63 = dma.hbm_to_vmem [thread:$0]  %s56, 3200, %s58, [#allocation9], 128, 128, 8
    $region17: #{tpu_custom_call.1} parent=1 // pred_fallthru
      _
    // Predicated region
    $region18: #{tpu_custom_call.1} parent=1 // pred_check
      _
    $region19: #{tpu_custom_call.1} parent=1 // pred_check_branch
      %65 = sbr.rel (0) target = $region21
    $region20: #{tpu_custom_call.1} parent=1 // pred_region
      _
    $region21: #{tpu_custom_call.1} parent=1 // pred_fallthru
      _
    // Predicated region
    $region22: #{tpu_custom_call.1} parent=1 // pred_check
      _
    $region23: #{tpu_custom_call.1} parent=1 // pred_check_branch
      %67 = sbr.rel (0) target = $region25
    $region24: #{tpu_custom_call.1} parent=1 // pred_region
      %69 = vsyncadd [#allocation9], 0
      %s70 = sshll.u32 %s5, 4
      %s71 = int_to_ptr.hbm [resolvable:$true] %s70
      %s72 = sshll.u32 [#allocation10], 4
      %s73 = int_to_ptr.vmem [resolvable:$true] %s72
      %78 = dma.hbm_to_vmem [thread:$0]  %s71, 1600, %s73, [#allocation9], 64, 64, 4
    $region25: #{tpu_custom_call.1} parent=1 // pred_fallthru
      _
    // Predicated region
    $region26: #{tpu_custom_call.1} parent=1 // pred_check
      _
    $region27: #{tpu_custom_call.1} parent=1 // pred_check_branch
      %80 = sbr.rel (0) target = $region29
    $region28: #{tpu_custom_call.1} parent=1 // pred_region
      _
    $region29: #{tpu_custom_call.1} parent=1 // pred_fallthru
      _
    // Predicated region
    $region30: #{tpu_custom_call.1} parent=1 // pred_check
      _
    $region31: #{tpu_custom_call.1} parent=1 // pred_check_branch
      %82 = sbr.rel (0) target = $region33
    $region32: #{tpu_custom_call.1} parent=1 // pred_region
      %84 = dma.done [#allocation3], 128
    $region33: #{tpu_custom_call.1} parent=1 // pred_fallthru
      _
    // Predicated region
    $region34: #{tpu_custom_call.1} parent=1 // pred_check
      _
    $region35: #{tpu_custom_call.1} parent=1 // pred_check_branch
      %86 = sbr.rel (0) target = $region37
    $region36: #{tpu_custom_call.1} parent=1 // pred_region
      %88 = dma.done [#allocation6], 256
    $region37: #{tpu_custom_call.1} parent=1 // pred_fallthru
      _
    // Predicated region
    $region38: #{tpu_custom_call.1} parent=1 // pred_check
      _
    $region39: #{tpu_custom_call.1} parent=1 // pred_check_branch
      %90 = sbr.rel (0) target = $region41
    $region40: #{tpu_custom_call.1} parent=1 // pred_region
      %92 = dma.done [#allocation6], 32
    $region41: #{tpu_custom_call.1} parent=1 // pred_fallthru
      _
    // Predicated region
    $region42: #{tpu_custom_call.1} parent=1 // pred_check
      _
    $region43: #{tpu_custom_call.1} parent=1 // pred_check_branch
      %94 = sbr.rel (0) target = $region45
    $region44: #{tpu_custom_call.1} parent=1 // pred_region
      %96 = dma.done [#allocation9], 3200
    $region45: #{tpu_custom_call.1} parent=1 // pred_fallthru
      _
    // Predicated region
    $region46: #{tpu_custom_call.1} parent=1 // pred_check
      _
    $region47: #{tpu_custom_call.1} parent=1 // pred_check_branch
      %98 = sbr.rel (0) target = $region49
    $region48: #{tpu_custom_call.1} parent=1 // pred_region
      %100 = dma.done [#allocation9], 1600
    $region49: #{tpu_custom_call.1} parent=1 // pred_fallthru
      _
    %v102 = vld [vmem:[#allocation2] sm:$0xff]
    %v103 = vpack.c.bf16 %v102, %v102
    %v104 = vld [vmem:[#allocation5] sm:$0xff]
    %v105 = vld [vmem:[#allocation5 + $0x8] sm:$0xff]
    %v106 = vld [vmem:[#allocation7] sm:$0x3]
    %v108 = vperm.slane %v106, 0
    %v109 = vperm.slane %v106, 1
    %v114 = vunpack.c.l.b16 %v104
    %v115 = vunpack.c.h.b16 %v104
    %v116 = vunpack.c.l.b16 %v105
    %v117 = vunpack.c.h.b16 %v105
    %v118 = vpack.c.b16 %v116, %v114
    %v119 = vpack.c.b16 %v117, %v115
    %vm120 = vcmask 121856
    %v122 = vsel %vm120, %v103, 0
    %vm124 = vcmask 1046528
    %vm125 = vcmask 1047552
    %v126 = vsel %vm124, 4294967295, 65535
    %v127 = vsel %vm125, %v126, 0
    %v129 = vand.u32 %v118, %v127
    %v132 = vand.u32 %v119, %v127
    %134 = vmatpush.bf16.msra.mxu0 0
    %135 = vmatpush.bf16.msra.mxu0 0
    %136 = vmatpush.bf16.msra.mxu0 0
    %137 = vmatpush.bf16.msra.mxu0 0
    %138 = vmatpush.bf16.msra.mxu0 0
    %139 = vmatpush.bf16.msra.mxu0 0
    %140 = vmatpush.bf16.msra.mxu0 0
    %141 = vmatpush.bf16.msra.mxu0 %v129
    %142 = vmatmul.bf16.gmra.mxu0 %v122
    %v143 = vpop.f32.mrf.mxu0
    %v144 = vadd.f32 %v108, %v143
    %v145 = vpop.f32.mrf.mxu0
    %146 = vdwg.mxu0
    %147 = vmatpush.bf16.msra.mxu0 0
    %148 = vmatpush.bf16.msra.mxu0 0
    %149 = vmatpush.bf16.msra.mxu0 0
    %150 = vmatpush.bf16.msra.mxu0 0
    %151 = vmatpush.bf16.msra.mxu0 0
    %152 = vmatpush.bf16.msra.mxu0 0
    %153 = vmatpush.bf16.msra.mxu0 0
    %154 = vmatpush.bf16.msra.mxu0 %v132
    %155 = vmatmul.bf16.gmra.mxu0 %v122
    %v156 = vpop.f32.mrf.mxu0
    %v157 = vadd.f32 %v109, %v156
    %v158 = vpop.f32.mrf.mxu0
    %159 = vdwg.mxu0
    %v160 = vmax.f32 %v144, 0.0
    %v161 = vmax.f32 %v157, 0.0
    %v162 = vpack.c.bf16 %v160, %v160
    %v163 = vpack.c.bf16 %v161, %v161
    %v164 = vld [vmem:[#allocation8] sm:$0xff]
    %v165 = vld [vmem:[#allocation8 + $0x8] sm:$0xff]
    %v166 = vld [vmem:[#allocation8 + $0x10] sm:$0xff]
    %v167 = vld [vmem:[#allocation8 + $0x18] sm:$0xff]
    %v168 = vld [vmem:[#allocation8 + $0x20] sm:$0xff]
    %v169 = vld [vmem:[#allocation8 + $0x28] sm:$0xff]
    %v170 = vld [vmem:[#allocation8 + $0x30] sm:$0xff]
    %v171 = vld [vmem:[#allocation8 + $0x38] sm:$0xff]
    %v172 = vld [vmem:[#allocation8 + $0x40] sm:$0xff]
    %v173 = vld [vmem:[#allocation8 + $0x48] sm:$0xff]
    %v174 = vld [vmem:[#allocation8 + $0x50] sm:$0xff]
    %v175 = vld [vmem:[#allocation8 + $0x58] sm:$0xff]
    %v176 = vld [vmem:[#allocation8 + $0x60] sm:$0xff]
    %v177 = vld [vmem:[#allocation8 + $0x68] sm:$0xff]
    %v178 = vld [vmem:[#allocation8 + $0x70] sm:$0xff]
    %v179 = vld [vmem:[#allocation8 + $0x78] sm:$0xff]
    %v180 = vld [vmem:[#allocation8 + $0x80] sm:$0xff]
    %v181 = vld [vmem:[#allocation8 + $0x88] sm:$0xff]
    %v182 = vld [vmem:[#allocation8 + $0x90] sm:$0xff]
    %v183 = vld [vmem:[#allocation8 + $0x98] sm:$0xff]
    %v184 = vld [vmem:[#allocation8 + $0xa0] sm:$0xff]
    %v185 = vld [vmem:[#allocation8 + $0xa8] sm:$0xff]
    %v186 = vld [vmem:[#allocation8 + $0xb0] sm:$0xff]
    %v187 = vld [vmem:[#allocation8 + $0xb8] sm:$0xff]
    %v188 = vld [vmem:[#allocation8 + $0xc0] sm:$0xff]
    %v189 = vld [vmem:[%s4] sm:$0x3]
    %v191 = vperm.slane %v189, 0
    %v192 = vperm.slane %v189, 1
    %v220 = vunpack.c.l.b16 %v164
    %v221 = vunpack.c.h.b16 %v164
    %v222 = vunpack.c.l.b16 %v165
    %v223 = vunpack.c.h.b16 %v165
    %v224 = vunpack.c.l.b16 %v166
    %v225 = vunpack.c.h.b16 %v166
    %v226 = vunpack.c.l.b16 %v167
    %v227 = vunpack.c.h.b16 %v167
    %v228 = vunpack.c.l.b16 %v168
    %v229 = vunpack.c.h.b16 %v168
    %v230 = vunpack.c.l.b16 %v169
    %v231 = vunpack.c.h.b16 %v169
    %v232 = vunpack.c.l.b16 %v170
    %v233 = vunpack.c.h.b16 %v170
    %v234 = vunpack.c.l.b16 %v171
    %v235 = vunpack.c.h.b16 %v171
    %v236 = vunpack.c.l.b16 %v172
    %v237 = vunpack.c.h.b16 %v172
    %v238 = vunpack.c.l.b16 %v173
    %v239 = vunpack.c.h.b16 %v173
    %v240 = vunpack.c.l.b16 %v174
    %v241 = vunpack.c.h.b16 %v174
    %v242 = vunpack.c.l.b16 %v175
    %v243 = vunpack.c.h.b16 %v175
    %v244 = vunpack.c.l.b16 %v176
    %v245 = vunpack.c.h.b16 %v176
    %v246 = vunpack.c.l.b16 %v177
    %v247 = vunpack.c.h.b16 %v177
    %v248 = vunpack.c.l.b16 %v178
    %v249 = vunpack.c.h.b16 %v178
    %v250 = vunpack.c.l.b16 %v179
    %v251 = vunpack.c.h.b16 %v179
    %v252 = vunpack.c.l.b16 %v180
    %v253 = vunpack.c.h.b16 %v180
    %v254 = vunpack.c.l.b16 %v181
    %v255 = vunpack.c.h.b16 %v181
    %v256 = vunpack.c.l.b16 %v182
    %v257 = vunpack.c.h.b16 %v182
    %v258 = vunpack.c.l.b16 %v183
    %v259 = vunpack.c.h.b16 %v183
    %v260 = vunpack.c.l.b16 %v184
    %v261 = vunpack.c.h.b16 %v184
    %v262 = vunpack.c.l.b16 %v185
    %v263 = vunpack.c.h.b16 %v185
    %v264 = vunpack.c.l.b16 %v186
    %v265 = vunpack.c.h.b16 %v186
    %v266 = vunpack.c.l.b16 %v187
    %v267 = vunpack.c.h.b16 %v187
    %v268 = vunpack.c.l.b16 %v188
    %v269 = vunpack.c.h.b16 %v188
    %v270 = vpack.c.b16 %v222, %v220
    %v271 = vpack.c.b16 %v223, %v221
    %v272 = vpack.c.b16 %v226, %v224
    %v273 = vpack.c.b16 %v227, %v225
    %v274 = vpack.c.b16 %v230, %v228
    %v275 = vpack.c.b16 %v231, %v229
    %v276 = vpack.c.b16 %v234, %v232
    %v277 = vpack.c.b16 %v235, %v233
    %v278 = vpack.c.b16 %v238, %v236
    %v279 = vpack.c.b16 %v239, %v237
    %v280 = vpack.c.b16 %v242, %v240
    %v281 = vpack.c.b16 %v243, %v241
    %v282 = vpack.c.b16 %v246, %v244
    %v283 = vpack.c.b16 %v247, %v245
    %v284 = vpack.c.b16 %v250, %v248
    %v285 = vpack.c.b16 %v251, %v249
    %v286 = vpack.c.b16 %v254, %v252
    %v287 = vpack.c.b16 %v255, %v253
    %v288 = vpack.c.b16 %v258, %v256
    %v289 = vpack.c.b16 %v259, %v257
    %v290 = vpack.c.b16 %v262, %v260
    %v291 = vpack.c.b16 %v263, %v261
    %v292 = vpack.c.b16 %v266, %v264
    %v293 = vpack.c.b16 %v267, %v265
    %v294 = vpack.c.b16 %v268, %v268
    %v295 = vpack.c.b16 %v269, %v269
    %vm320 = vcmask 588800
    %v322 = vsel %vm320, %v163, 0
    %vm324 = vcmask 1043456
    %v326 = vsel %vm324, %v294, 0
    %v329 = vsel %vm324, %v295, 0
    %331 = vmatpush.bf16.msra.mxu0 %v284
    %332 = vmatpush.bf16.msra.mxu0 %v282
    %333 = vmatpush.bf16.msra.mxu0 %v280
    %334 = vmatpush.bf16.msra.mxu0 %v278
    %335 = vmatpush.bf16.msra.mxu0 %v276
    %336 = vmatpush.bf16.msra.mxu0 %v274
    %337 = vmatpush.bf16.msra.mxu0 %v272
    %338 = vmatpush.bf16.msra.mxu0 %v270
    %339 = vmatmul.bf16.gmra.mxu0 %v162
    %v340 = vpop.f32.mrf.mxu0
    %v341 = vadd.f32 %v191, %v340
    %v342 = vpop.f32.mrf.mxu0
    %343 = vdwg.mxu0
    %344 = vmatpush.bf16.msra.mxu0 0
    %345 = vmatpush.bf16.msra.mxu0 0
    %346 = vmatpush.bf16.msra.mxu0 0
    %347 = vmatpush.bf16.msra.mxu0 %v326
    %348 = vmatpush.bf16.msra.mxu0 %v292
    %349 = vmatpush.bf16.msra.mxu0 %v290
    %350 = vmatpush.bf16.msra.mxu0 %v288
    %351 = vmatpush.bf16.msra.mxu0 %v286
    %352 = vmatmul.bf16.gmra.mxu0 %v322
    %v353 = vpop.f32.mrf.mxu0
    %v354 = vadd.f32 %v341, %v353
    %v355 = vpop.f32.mrf.mxu0
    %356 = vdwg.mxu0
    %357 = vmatpush.bf16.msra.mxu0 %v285
    %358 = vmatpush.bf16.msra.mxu0 %v283
    %359 = vmatpush.bf16.msra.mxu0 %v281
    %360 = vmatpush.bf16.msra.mxu0 %v279
    %361 = vmatpush.bf16.msra.mxu0 %v277
    %362 = vmatpush.bf16.msra.mxu0 %v275
    %363 = vmatpush.bf16.msra.mxu0 %v273
    %364 = vmatpush.bf16.msra.mxu0 %v271
    %365 = vmatmul.bf16.gmra.mxu0 %v162
    %v366 = vpop.f32.mrf.mxu0
    %v367 = vadd.f32 %v192, %v366
    %v368 = vpop.f32.mrf.mxu0
    %369 = vdwg.mxu0
    %370 = vmatpush.bf16.msra.mxu0 0
    %371 = vmatpush.bf16.msra.mxu0 0
    %372 = vmatpush.bf16.msra.mxu0 0
    %373 = vmatpush.bf16.msra.mxu0 %v329
    %374 = vmatpush.bf16.msra.mxu0 %v293
    %375 = vmatpush.bf16.msra.mxu0 %v291
    %376 = vmatpush.bf16.msra.mxu0 %v289
    %377 = vmatpush.bf16.msra.mxu0 %v287
    %378 = vmatmul.bf16.gmra.mxu0 %v322
    %v379 = vpop.f32.mrf.mxu0
    %v380 = vadd.f32 %v367, %v379
    %v381 = vpop.f32.mrf.mxu0
    %382 = vdwg.mxu0
    %v383 = vmax.f32 %v354, 0.0
    %v384 = vmax.f32 %v380, 0.0
    %v385 = vpack.c.bf16 %v383, %v383
    %v386 = vpack.c.bf16 %v384, %v384
    %v387 = vld [vmem:[#allocation10] sm:$0xf]
    %v388 = vld [vmem:[#allocation10 + $0x4] sm:$0xf]
    %v389 = vld [vmem:[#allocation10 + $0x8] sm:$0xf]
    %v390 = vld [vmem:[#allocation10 + $0xc] sm:$0xf]
    %v391 = vld [vmem:[#allocation10 + $0x10] sm:$0xf]
    %v392 = vld [vmem:[#allocation10 + $0x14] sm:$0xf]
    %v393 = vld [vmem:[#allocation10 + $0x18] sm:$0xf]
    %v394 = vld [vmem:[#allocation10 + $0x1c] sm:$0xf]
    %v395 = vld [vmem:[#allocation10 + $0x20] sm:$0xf]
    %v396 = vld [vmem:[#allocation10 + $0x24] sm:$0xf]
    %v397 = vld [vmem:[#allocation10 + $0x28] sm:$0xf]
    %v398 = vld [vmem:[#allocation10 + $0x2c] sm:$0xf]
    %v399 = vld [vmem:[#allocation10 + $0x30] sm:$0xf]
    %v400 = vld [vmem:[#allocation10 + $0x34] sm:$0xf]
    %v401 = vld [vmem:[#allocation10 + $0x38] sm:$0xf]
    %v402 = vld [vmem:[#allocation10 + $0x3c] sm:$0xf]
    %v403 = vld [vmem:[#allocation10 + $0x40] sm:$0xf]
    %v404 = vld [vmem:[#allocation10 + $0x44] sm:$0xf]
    %v405 = vld [vmem:[#allocation10 + $0x48] sm:$0xf]
    %v406 = vld [vmem:[#allocation10 + $0x4c] sm:$0xf]
    %v407 = vld [vmem:[#allocation10 + $0x50] sm:$0xf]
    %v408 = vld [vmem:[#allocation10 + $0x54] sm:$0xf]
    %v409 = vld [vmem:[#allocation10 + $0x58] sm:$0xf]
    %v410 = vld [vmem:[#allocation10 + $0x5c] sm:$0xf]
    %v411 = vld [vmem:[#allocation10 + $0x60] sm:$0xf]
    %v412 = vld [vmem:[%s6] sm:$0x1]
    %v414 = vperm.slane %v412, 0
    %v441 = vunpack.c.l.b16 %v387
    %v442 = vunpack.c.l.b16 %v388
    %v443 = vunpack.c.l.b16 %v389
    %v444 = vunpack.c.l.b16 %v390
    %v445 = vunpack.c.l.b16 %v391
    %v446 = vunpack.c.l.b16 %v392
    %v447 = vunpack.c.l.b16 %v393
    %v448 = vunpack.c.l.b16 %v394
    %v449 = vunpack.c.l.b16 %v395
    %v450 = vunpack.c.l.b16 %v396
    %v451 = vunpack.c.l.b16 %v397
    %v452 = vunpack.c.l.b16 %v398
    %v453 = vunpack.c.l.b16 %v399
    %v454 = vunpack.c.l.b16 %v400
    %v455 = vunpack.c.l.b16 %v401
    %v456 = vunpack.c.l.b16 %v402
    %v457 = vunpack.c.l.b16 %v403
    %v458 = vunpack.c.l.b16 %v404
    %v459 = vunpack.c.l.b16 %v405
    %v460 = vunpack.c.l.b16 %v406
    %v461 = vunpack.c.l.b16 %v407
    %v462 = vunpack.c.l.b16 %v408
    %v463 = vunpack.c.l.b16 %v409
    %v464 = vunpack.c.l.b16 %v410
    %v465 = vunpack.c.l.b16 %v411
    %v466 = vpack.c.b16 %v442, %v441
    %v467 = vpack.c.b16 %v444, %v443
    %v468 = vpack.c.b16 %v446, %v445
    %v469 = vpack.c.b16 %v448, %v447
    %v470 = vpack.c.b16 %v450, %v449
    %v471 = vpack.c.b16 %v452, %v451
    %v472 = vpack.c.b16 %v454, %v453
    %v473 = vpack.c.b16 %v456, %v455
    %v474 = vpack.c.b16 %v458, %v457
    %v475 = vpack.c.b16 %v460, %v459
    %v476 = vpack.c.b16 %v462, %v461
    %v477 = vpack.c.b16 %v464, %v463
    %v478 = vpack.c.b16 %v465, %v465
    %v492 = vsel %vm320, %v386, 0
    %v495 = vsel %vm324, %v478, 0
    %497 = vmatpush.bf16.msra.mxu0 %v473
    %498 = vmatpush.bf16.msra.mxu0 %v472
    %499 = vmatpush.bf16.msra.mxu0 %v471
    %500 = vmatpush.bf16.msra.mxu0 %v470
    %501 = vmatpush.bf16.msra.mxu0 %v469
    %502 = vmatpush.bf16.msra.mxu0 %v468
    %503 = vmatpush.bf16.msra.mxu0 %v467
    %504 = vmatpush.bf16.msra.mxu0 %v466
    %505 = vmatmul.bf16.gmra.mxu0 %v385
    %v506 = vpop.f32.mrf.mxu0
    %v507 = vadd.f32 %v414, %v506
    %v508 = vpop.f32.mrf.mxu0
    %509 = vdwg.mxu0
    %510 = vmatpush.bf16.msra.mxu0 0
    %511 = vmatpush.bf16.msra.mxu0 0
    %512 = vmatpush.bf16.msra.mxu0 0
    %513 = vmatpush.bf16.msra.mxu0 %v495
    %514 = vmatpush.bf16.msra.mxu0 %v477
    %515 = vmatpush.bf16.msra.mxu0 %v476
    %516 = vmatpush.bf16.msra.mxu0 %v475
    %517 = vmatpush.bf16.msra.mxu0 %v474
    %518 = vmatmul.bf16.gmra.mxu0 %v492
    %v519 = vpop.f32.mrf.mxu0
    %v520 = vadd.f32 %v507, %v519
    %v521 = vpop.f32.mrf.mxu0
    %522 = vdwg.mxu0
    %523 = vst [vmem:[#allocation11] sm:$0xff] %v520
    // Predicated region
    $region50: #{tpu_custom_call.1} parent=1 // pred_check
      _
    $region51: #{tpu_custom_call.1} parent=1 // pred_check_branch
      %525 = sbr.rel (0) target = $region53
    $region52: #{tpu_custom_call.1} parent=1 // pred_region
      %527 = vsyncadd [#allocation4], 0
      %s529 = sshll.u32 [#allocation11], 4
      %s530 = int_to_ptr.vmem [resolvable:$true] %s529
      %s531 = sshll.u32 %s7, 4
      %s532 = int_to_ptr.hbm [resolvable:$true] %s531
      %534 = dma.vmem_to_hbm [thread:$0]  %s530, 128, %s532, [#allocation4]
    $region53: #{tpu_custom_call.1} parent=1 // pred_fallthru
      _
    // Predicated region
    $region54: #{tpu_custom_call.1} parent=1 // pred_check
      _
    $region55: #{tpu_custom_call.1} parent=1 // pred_check_branch
      %536 = sbr.rel (0) target = $region57
    $region56: #{tpu_custom_call.1} parent=1 // pred_region
      %538 = dma.done [#allocation4], 128
    $region57: #{tpu_custom_call.1} parent=1 // pred_fallthru
      _
    %539 = vsyncpa [#allocation3], 1
    %540 = vsyncpa [#allocation6], 1
    %541 = vsyncpa [#allocation9], 1
    %542 = vsyncpa [#allocation4], 1

</llo_original>
